<compile_context>
chip_gen: v6e
topology: v6e:2x2x1
jax: 0.10.0
libtpu: 0.0.40
codegen_flags: <defaults>
</compile_context>

<pallas_src>
import math

import jax
import jax.numpy as jnp
from jax.experimental import pallas as pl
from jax.experimental.pallas import tpu as pltpu

_LANE = 128
_VREG_BYTES = 4096
_TR_MAX = 32768


def _cdiv(a, b):
    return -(-a // b)


def _round_up(a, b):
    return ((a + b - 1) // b) * b


def _chip_config():
    """Per-generation block budget / VMEM limit / TensorCore-count settings."""
    kind = ""
    try:
        kind = jax.devices()[0].device_kind.lower()
    except Exception:
        pass
    if "v7" in kind or "tpu7" in kind:
        # 64 MiB VMEM (32 MiB scoped default), 2 TensorCores/chip, 3.2 TB/s HBM.
        return {"budget": 8 << 20, "vmem_cap": 36 << 20, "two_tc": True}
    if "v2" in kind or "v3" in kind:
        # Legacy small-VMEM parts: stay conservative.
        return {"budget": 2 << 20, "vmem_cap": 14 << 20, "two_tc": False}
    if "v4" in kind or "v5p" in kind:
        # 128 MiB VMEM, megacore (2 TensorCores).
        return {"budget": 16 << 20, "vmem_cap": 64 << 20, "two_tc": True}
    # v5e / v6e / unknown: 128 MiB VMEM, single TensorCore.
    return {"budget": 16 << 20, "vmem_cap": 64 << 20, "two_tc": False}


def _min_value(dtype):
    """Identity element for max in `dtype` (used only to mask ragged reduce tails)."""
    dtype = jnp.dtype(dtype)
    if jnp.issubdtype(dtype, jnp.floating):
        name = dtype.name
        if name.startswith("float8_e4m3") or name.startswith("float8_e8m0") or name.startswith("float4"):
            return float(jnp.finfo(dtype).min)  # finite-only float formats
        return float("-inf")
    if jnp.issubdtype(dtype, jnp.integer):
        return int(jnp.iinfo(dtype).min)
    return 0


# ----------------------------------------------------------------------------
# Kernels
# ----------------------------------------------------------------------------
def _make_lane_reduce_kernel(nd, td, d_rem, min_val):
    """Max over the last (lane) axis of a (tr, td) tile; running max over grid axis 1."""
    if nd == 1:
        def kernel(x_ref, o_ref):
            o_ref[...] = jnp.max(x_ref[...], axis=-1, keepdims=True)
        return kernel

    def kernel(x_ref, o_ref):
        k = pl.program_id(1)
        x = x_ref[...]
        if d_rem:
            # Last D tile is ragged: out-of-bounds lanes hold undefined data.
            col = jax.lax.broadcasted_iota(jnp.int32, x.shape, 1)
            limit = jnp.where(k == nd - 1, d_rem, td)
            x = jnp.where(col < limit, x, jnp.asarray(min_val, dtype=x.dtype))
        part = jnp.max(x, axis=-1, keepdims=True)

        @pl.when(k == 0)
        def _init():
            o_ref[...] = part

        @pl.when(k > 0)
        def _update():
            o_ref[...] = jnp.maximum(o_ref[...], part)

    return kernel


def _make_sublane_reduce_kernel(nred, tred, red_rem, min_val):
    """Max over axis 1 (sublanes) of a (tpre, tred, tpost) tile; running max over grid axis 2."""
    if nred == 1:
        def kernel(x_ref, o_ref):
            o_ref[...] = jnp.max(x_ref[...], axis=1)
        return kernel

    def kernel(x_ref, o_ref):
        k = pl.program_id(2)
        x = x_ref[...]
        if red_rem:
            row = jax.lax.broadcasted_iota(jnp.int32, x.shape, 1)
            limit = jnp.where(k == nred - 1, red_rem, tred)
            x = jnp.where(row < limit, x, jnp.asarray(min_val, dtype=x.dtype))
        part = jnp.max(x, axis=1)

        @pl.when(k == 0)
        def _init():
            o_ref[...] = part

        @pl.when(k > 0)
        def _update():
            o_ref[...] = jnp.maximum(o_ref[...], part)

    return kernel


# ----------------------------------------------------------------------------
# dim == -1: lane reduce
# ----------------------------------------------------------------------------
def _max_last_dim(x, sub, min_val, budget_vregs, vmem_cap, two_tc):
    lead_shape = x.shape[:-1]
    D = int(x.shape[-1])
    R = int(math.prod(lead_shape))
    dtype = x.dtype
    x2d = x.reshape(R, D)

    # --- reduction-axis (lane) tiling ---------------------------------------
    lane_full = _cdiv(D, _LANE)
    MIN_ROW_VREGS = 8
    if MIN_ROW_VREGS * lane_full <= budget_vregs:
        td, nd, d_rem = D, 1, 0                       # full width in one block
    else:
        td = max(1, budget_vregs // MIN_ROW_VREGS) * _LANE
        nd = _cdiv(D, td)
        d_rem = D % td
    lane_vregs = _cdiv(td, _LANE)

    # --- row (parallel) tiling -----------------------------------------------
    # Budget counts the input block plus the lane-sparse (tr, 1) output block
    # (one vreg per `sub` rows) living alongside it.
    tr_cap = (R // sub) * sub if R >= sub else sub
    tr = sub * max(1, budget_vregs // (lane_vregs + 1))
    tr = max(sub, min(tr, _TR_MAX, tr_cap))
    nr = _cdiv(R, tr)
    tr = max(sub, min(tr_cap, _round_up(_cdiv(R, nr), sub)))  # balance tiles
    nr = _cdiv(R, tr)
    if two_tc and nr < 2 and R >= 2 * sub:
        # Two TensorCores: make sure the "parallel" row axis has >= 2 steps.
        tr = max(sub, min(tr_cap, _round_up(_cdiv(R, 2), sub)))
        nr = _cdiv(R, tr)

    in_block = _cdiv(tr, sub) * lane_vregs * _VREG_BYTES
    out_block = _cdiv(tr, sub) * _VREG_BYTES
    vmem_limit = int(min(vmem_cap, max(16 << 20, 4 * (in_block + out_block))))

    kernel = _make_lane_reduce_kernel(nd, td, d_rem, min_val)
    if nd == 1:
        grid = (nr,)
        in_specs = [pl.BlockSpec((tr, D), lambda i: (i, 0))]
        out_specs = pl.BlockSpec((tr, 1), lambda i: (i, 0))
        dim_sem = ("parallel",)
    else:
        grid = (nr, nd)
        in_specs = [pl.BlockSpec((tr, td), lambda i, k: (i, k))]
        out_specs = pl.BlockSpec((tr, 1), lambda i, k: (i, 0))
        dim_sem = ("parallel", "arbitrary")

    out2d = pl.pallas_call(
        kernel,
        out_shape=jax.ShapeDtypeStruct((R, 1), dtype),
        grid_spec=pltpu.PrefetchScalarGridSpec(
            num_scalar_prefetch=0,
            grid=grid,
            in_specs=in_specs,
            out_specs=out_specs,
        ),
        compiler_params=pltpu.CompilerParams(
            dimension_semantics=dim_sem,
            vmem_limit_bytes=vmem_limit,
        ),
    )(x2d)
    return out2d[:, 0].reshape(lead_shape)


# ----------------------------------------------------------------------------
# dim != -1: reduce in original layout (reduced axis on sublanes / grid)
# ----------------------------------------------------------------------------
def _max_middle_dim(x, dim, sub, min_val, budget_vregs, vmem_cap, two_tc):
    shape = x.shape
    dtype = x.dtype
    Rpre = int(math.prod(shape[:dim]))
    Dred = int(shape[dim])
    Rpost = int(math.prod(shape[dim + 1:]))
    x3 = x.reshape(Rpre, Dred, Rpost)  # free view: the reduced axis stays put

    # Minimum pre rows per block forced by the output layout (second-minor dim
    # of the (tpre, tpost) output block must be a multiple of `sub` or == Rpre).
    pre_min = sub if Rpre >= sub else Rpre

    # --- post (lane, parallel) tiling ----------------------------------------
    lane_full = _cdiv(Rpost, _LANE)
    lane_vregs = min(lane_full, max(1, budget_vregs // max(1, pre_min)))
    tpost = Rpost if lane_vregs >= lane_full else lane_vregs * _LANE
    lane_vregs = _cdiv(tpost, _LANE)
    npost = _cdiv(Rpost, tpost)

    # --- reduced (sublane, arbitrary) tiling ----------------------------------
    red_full = _cdiv(Dred, sub)
    red_budget = max(1, budget_vregs // (lane_vregs * max(1, pre_min)))
    if red_full <= red_budget:
        tred, nred, red_rem = Dred, 1, 0
    else:
        tred = red_budget * sub
        nred = _cdiv(Dred, tred)
        red_rem = Dred % tred
    red_vregs = _cdiv(tred, sub)

    # --- pre (leading, parallel) tiling ---------------------------------------
    per_pre_vregs = red_vregs * lane_vregs
    tpre_budget = max(pre_min, budget_vregs // max(1, per_pre_vregs))
    if tpre_budget >= Rpre:
        tpre = Rpre
    else:
        tpre = max(pre_min, min((tpre_budget // sub) * sub, (Rpre // sub) * sub))
    npre = _cdiv(Rpre, tpre)

    # Two TensorCores: make sure some parallel axis has >= 2 steps.
    if two_tc and npre * npost < 2:
        if Rpre >= 2 * sub:
            tpre = _round_up(_cdiv(Rpre, 2), sub)
            npre = _cdiv(Rpre, tpre)
        elif Rpost >= 2 * _LANE:
            tpost = _round_up(_cdiv(Rpost, 2), _LANE)
            npost = _cdiv(Rpost, tpost)
            lane_vregs = _cdiv(tpost, _LANE)

    in_block = tpre * red_vregs * lane_vregs * _VREG_BYTES
    out_block = _cdiv(tpre, sub) * lane_vregs * _VREG_BYTES
    vmem_limit = int(min(vmem_cap, max(16 << 20, 4 * (in_block + out_block))))

    kernel = _make_sublane_reduce_kernel(nred, tred, red_rem, min_val)
    if nred == 1:
        grid = (npre, npost)
        in_specs = [pl.BlockSpec((tpre, tred, tpost), lambda i, j: (i, 0, j))]
        out_specs = pl.BlockSpec((tpre, tpost), lambda i, j: (i, j))
        dim_sem = ("parallel", "parallel")
    else:
        grid = (npre, npost, nred)
        in_specs = [pl.BlockSpec((tpre, tred, tpost), lambda i, j, k: (i, k, j))]
        out_specs = pl.BlockSpec((tpre, tpost), lambda i, j, k: (i, j))
        dim_sem = ("parallel", "parallel", "arbitrary")

    out2d = pl.pallas_call(
        kernel,
        out_shape=jax.ShapeDtypeStruct((Rpre, Rpost), dtype),
        grid_spec=pltpu.PrefetchScalarGridSpec(
            num_scalar_prefetch=0,
            grid=grid,
            in_specs=in_specs,
            out_specs=out_specs,
        ),
        compiler_params=pltpu.CompilerParams(
            dimension_semantics=dim_sem,
            vmem_limit_bytes=vmem_limit,
        ),
    )(x3)
    return out2d.reshape(shape[:dim] + shape[dim + 1:])


# ----------------------------------------------------------------------------
# Public wrapper
# ----------------------------------------------------------------------------
def global_max_pooling(x, dim=-1, *, block_budget_bytes=None):
    """Pallas TPU equivalent of torch `x.max(dim=dim)[0]` (values only)."""
    ndim = x.ndim
    dim = dim % ndim
    dtype = x.dtype

    if dtype == jnp.bool_:
        # bool max lowering in Mosaic is unreliable; compute in uint8.
        out = global_max_pooling(x.astype(jnp.uint8), dim,
                                 block_budget_bytes=block_budget_bytes)
        return out.astype(jnp.bool_)

    cfg = _chip_config()
    budget = int(block_budget_bytes) if block_budget_bytes else cfg["budget"]
    budget_vregs = max(1, budget // _VREG_BYTES)
    vmem_cap = cfg["vmem_cap"]
    two_tc = cfg["two_tc"]

    itemsize = jnp.dtype(dtype).itemsize
    sub = {1: 32, 2: 16, 4: 8}.get(itemsize, 8)  # sublane rows packed per vreg
    min_val = _min_value(dtype)

    if dim == ndim - 1:
        return _max_last_dim(x, sub, min_val, budget_vregs, vmem_cap, two_tc)
    return _max_middle_dim(x, dim, sub, min_val, budget_vregs, vmem_cap, two_tc)


if __name__ == "__main__":
    key = jax.random.PRNGKey(0)
    keys = jax.random.split(key, 8)

    # Main case: NCHW-style input, GlobalMaxPooling(dim=-1) reduces over W.
    x = jax.random.normal(keys[0], (2, 4, 16, 16), dtype=jnp.float32)
    out = jax.block_until_ready(global_max_pooling(x, dim=-1))
    ref = jnp.max(x, axis=-1)
    assert out.shape == ref.shape == (2, 4, 16)
    assert jnp.allclose(out, ref), "mismatch vs reference (dim=-1)"

    # Awkward row count -> exercises ragged row blocks (masked boundary store).
    x2 = jax.random.normal(keys[1], (3, 5, 26), dtype=jnp.float32)
    out2 = jax.block_until_ready(global_max_pooling(x2))
    assert jnp.allclose(out2, jnp.max(x2, axis=-1)), "mismatch (ragged rows)"

    # Non-last reduction dim: reduced in the original layout (no transpose).
    out3 = jax.block_until_ready(global_max_pooling(x, dim=1))
    assert jnp.allclose(out3, jnp.max(x, axis=1)), "mismatch (dim=1)"

    # Wider reduction width, single-block lane reduce.
    x4 = jax.random.normal(keys[2], (16, 1000), dtype=jnp.float32)
    out4 = jax.block_until_ready(global_max_pooling(x4))
    assert jnp.allclose(out4, jnp.max(x4, axis=-1)), "mismatch (wide D)"

    # Tiny block budget forces the tiled-reduction path + masked D tail.
    x5 = jax.random.normal(keys[3], (16, 300), dtype=jnp.float32)
    out5 = jax.block_until_ready(global_max_pooling(x5, block_budget_bytes=64 * 1024))
    assert jnp.allclose(out5, jnp.max(x5, axis=-1)), "mismatch (tiled D + mask)"

    # Tiny budget + dim != -1 forces tiled sublane reduction + masked red tail.
    x6 = jax.random.normal(keys[4], (8, 44, 256), dtype=jnp.float32)
    out6 = jax.block_until_ready(
        global_max_pooling(x6, dim=1, block_budget_bytes=16 * 1024))
    assert jnp.allclose(out6, jnp.max(x6, axis=1)), "mismatch (tiled sublane reduce)"

    # bfloat16 path (16-row sublane packing).
    xb = jax.random.normal(keys[5], (2, 4, 16, 16), dtype=jnp.bfloat16)
    outb = jax.block_until_ready(global_max_pooling(xb, dim=-1))
    assert jnp.array_equal(outb, jnp.max(xb, axis=-1)), "mismatch (bf16)"

    print("KERNEL_OK")
</pallas_src>

<mosaic_0001>
module attributes {stable_mosaic.version = 11 : i64} {
  func.func @kernel(%arg0: i32, %arg1: memref<128x16xf32, #tpu.memory_space<vmem>>, %arg2: memref<128x1xf32, #tpu.memory_space<vmem>>) attributes {dimension_semantics = [#tpu.dimension_semantics<parallel>], iteration_bounds = array<i64: 1>, scalar_prefetch = 0 : i64, scratch_operands = 0 : i64, tpu.core_type = #tpu.core_type<tc>, window_params = [{transform_indices = @transform_0, window_bounds = array<i64: 128, 16>}, {transform_indices = @transform_1, window_bounds = array<i64: 128, 1>}]} {
    %c0 = arith.constant 0 : index
    %c0_0 = arith.constant 0 : index
    %0 = vector.load %arg1[%c0, %c0_0] : memref<128x16xf32, #tpu.memory_space<vmem>>, vector<128x16xf32>
    %cst = arith.constant dense<0xFF800000> : vector<128xf32>
    %1 = vector.multi_reduction <maximumf>, %0, %cst [1] : vector<128x16xf32> to vector<128xf32>
    %2 = vector.shape_cast %1 : vector<128xf32> to vector<128x1xf32>
    %c0_1 = arith.constant 0 : index
    %c0_2 = arith.constant 0 : index
    %3 = vector.load %arg2[%c0_1, %c0_2] : memref<128x1xf32, #tpu.memory_space<vmem>>, vector<128x1xf32>
    tpu.vector_store %arg2[%c0_1, %c0_2], %2 {strides = array<i32>} : memref<128x1xf32, #tpu.memory_space<vmem>>, vector<128x1xf32>,
    return
  }
  func.func @transform_0(%arg0: i32) -> (i32, i32) {
    %c0_i32 = arith.constant 0 : i32
    %c0_i32_0 = arith.constant 0 : i32
    return %arg0, %c0_i32 : i32, i32
  }
  func.func @transform_1(%arg0: i32) -> (i32, i32) {
    %c0_i32 = arith.constant 0 : i32
    %c0_i32_0 = arith.constant 0 : i32
    return %arg0, %c0_i32 : i32, i32
  }
}

</mosaic_0001>

<llo_original>
// kernel: tpu_custom_call.1
$region0: #{tpu_custom_call.1}
  #allocation0 [shape = 'u32[]', space=smem, size = 0x4, offset = 0x4, fixed_abs, tag = 'smem constant byte address 0x4 - core index']
  #allocation1 [shape = 'u32[144,128]{1,0:T(1,128)}', space=vmem, size = 0x12000, scoped, tag = 'internal scratch']
  %s0 = inlined_call_operand.vmem [shape: f32[128,16], index: 0, kind: input, shape index: {}]
  %s1 = inlined_call_operand.vmem [shape: f32[128,1], index: 1, kind: output, shape index: {}]
  %s2 = sld [smem:[#allocation0]]
  $region14: #{tpu_custom_call.1} parent=0
    _
  %s4 = ssub.s32 1, %s2
  %s5 = scalar_select 0, %s4, %s2
  // Predicated region
  $region2: #{tpu_custom_call.1} parent=0 // pred_check
    _
  $region3: #{tpu_custom_call.1} parent=0 // pred_check_branch
    %7 = sbr.rel (0) target = $region5
  $region4: #{tpu_custom_call.1} parent=0 // pred_region
    _
  $region5: #{tpu_custom_call.1} parent=0 // pred_fallthru
    _
  %v8 = vld [vmem:[%s0] sm:$0xff]
  %v9 = vld [vmem:[%s0 + $0x8] sm:$0xff]
  %v10 = vld [vmem:[%s0 + $0x10] sm:$0xff]
  %v11 = vld [vmem:[%s0 + $0x18] sm:$0xff]
  %v12 = vld [vmem:[%s0 + $0x20] sm:$0xff]
  %v13 = vld [vmem:[%s0 + $0x28] sm:$0xff]
  %v14 = vld [vmem:[%s0 + $0x30] sm:$0xff]
  %v15 = vld [vmem:[%s0 + $0x38] sm:$0xff]
  %v16 = vld [vmem:[%s0 + $0x40] sm:$0xff]
  %v17 = vld [vmem:[%s0 + $0x48] sm:$0xff]
  %v18 = vld [vmem:[%s0 + $0x50] sm:$0xff]
  %v19 = vld [vmem:[%s0 + $0x58] sm:$0xff]
  %v20 = vld [vmem:[%s0 + $0x60] sm:$0xff]
  %v21 = vld [vmem:[%s0 + $0x68] sm:$0xff]
  %v22 = vld [vmem:[%s0 + $0x70] sm:$0xff]
  %v23 = vld [vmem:[%s0 + $0x78] sm:$0xff]
  %vm24 = vcmask 130048
  %v25 = vsel %vm24, %v8, -inf
  %26 = vmax.xlane.f32.xlu0 %v25
  %v27 = vpop.xlane.xlu0 %26
  %v28 = vsel %vm24, %v9, -inf
  %29 = vmax.xlane.f32.xlu0 %v28
  %v30 = vpop.xlane.xlu0 %29
  %v31 = vsel %vm24, %v10, -inf
  %32 = vmax.xlane.f32.xlu0 %v31
  %v33 = vpop.xlane.xlu0 %32
  %v34 = vsel %vm24, %v11, -inf
  %35 = vmax.xlane.f32.xlu0 %v34
  %v36 = vpop.xlane.xlu0 %35
  %v37 = vsel %vm24, %v12, -inf
  %38 = vmax.xlane.f32.xlu0 %v37
  %v39 = vpop.xlane.xlu0 %38
  %v40 = vsel %vm24, %v13, -inf
  %41 = vmax.xlane.f32.xlu0 %v40
  %v42 = vpop.xlane.xlu0 %41
  %v43 = vsel %vm24, %v14, -inf
  %44 = vmax.xlane.f32.xlu0 %v43
  %v45 = vpop.xlane.xlu0 %44
  %v46 = vsel %vm24, %v15, -inf
  %47 = vmax.xlane.f32.xlu0 %v46
  %v48 = vpop.xlane.xlu0 %47
  %v49 = vsel %vm24, %v16, -inf
  %50 = vmax.xlane.f32.xlu0 %v49
  %v51 = vpop.xlane.xlu0 %50
  %v52 = vsel %vm24, %v17, -inf
  %53 = vmax.xlane.f32.xlu0 %v52
  %v54 = vpop.xlane.xlu0 %53
  %v55 = vsel %vm24, %v18, -inf
  %56 = vmax.xlane.f32.xlu0 %v55
  %v57 = vpop.xlane.xlu0 %56
  %v58 = vsel %vm24, %v19, -inf
  %59 = vmax.xlane.f32.xlu0 %v58
  %v60 = vpop.xlane.xlu0 %59
  %v61 = vsel %vm24, %v20, -inf
  %62 = vmax.xlane.f32.xlu0 %v61
  %v63 = vpop.xlane.xlu0 %62
  %v64 = vsel %vm24, %v21, -inf
  %65 = vmax.xlane.f32.xlu0 %v64
  %v66 = vpop.xlane.xlu0 %65
  %v67 = vsel %vm24, %v22, -inf
  %68 = vmax.xlane.f32.xlu0 %v67
  %v69 = vpop.xlane.xlu0 %68
  %v70 = vsel %vm24, %v23, -inf
  %71 = vmax.xlane.f32.xlu0 %v70
  %v72 = vpop.xlane.xlu0 %71
  %vm73 = vcmask 7168
  %74 = vst.msk [vmem:[%s1] sm:$0xff] %vm73, %v27
  %75 = vst.msk [vmem:[%s1 + $0x8] sm:$0xff] %vm73, %v30
  %76 = vst.msk [vmem:[%s1 + $0x10] sm:$0xff] %vm73, %v33
  %77 = vst.msk [vmem:[%s1 + $0x18] sm:$0xff] %vm73, %v36
  %78 = vst.msk [vmem:[%s1 + $0x20] sm:$0xff] %vm73, %v39
  %79 = vst.msk [vmem:[%s1 + $0x28] sm:$0xff] %vm73, %v42
  %80 = vst.msk [vmem:[%s1 + $0x30] sm:$0xff] %vm73, %v45
  %81 = vst.msk [vmem:[%s1 + $0x38] sm:$0xff] %vm73, %v48
  %82 = vst.msk [vmem:[%s1 + $0x40] sm:$0xff] %vm73, %v51
  %83 = vst.msk [vmem:[%s1 + $0x48] sm:$0xff] %vm73, %v54
  %84 = vst.msk [vmem:[%s1 + $0x50] sm:$0xff] %vm73, %v57
  %85 = vst.msk [vmem:[%s1 + $0x58] sm:$0xff] %vm73, %v60
  %86 = vst.msk [vmem:[%s1 + $0x60] sm:$0xff] %vm73, %v63
  %87 = vst.msk [vmem:[%s1 + $0x68] sm:$0xff] %vm73, %v66
  %88 = vst.msk [vmem:[%s1 + $0x70] sm:$0xff] %vm73, %v69
  %89 = vst.msk [vmem:[%s1 + $0x78] sm:$0xff] %vm73, %v72
  // Predicated region
  $region6: #{tpu_custom_call.1} parent=0 // pred_check
    _
  $region7: #{tpu_custom_call.1} parent=0 // pred_check_branch
    %91 = sbr.rel (0) target = $region9
  $region8: #{tpu_custom_call.1} parent=0 // pred_region
    _
  $region9: #{tpu_custom_call.1} parent=0 // pred_fallthru
    _
  // Predicated region
  $region10: #{tpu_custom_call.1} parent=0 // pred_check
    _
  $region11: #{tpu_custom_call.1} parent=0 // pred_check_branch
    %93 = sbr.rel (0) target = $region13
  $region12: #{tpu_custom_call.1} parent=0 // pred_region
    _
  $region13: #{tpu_custom_call.1} parent=0 // pred_fallthru
    _

</llo_original>
